<compile_context>
chip_gen: v6e
topology: v6e:2x2x1
jax: 0.10.0
libtpu: 0.0.40
codegen_flags: <defaults>
</compile_context>

<pallas_src>
import functools

import jax
import jax.numpy as jnp
from jax.experimental import pallas as pl
from jax.experimental.pallas import tpu as pltpu


def _gru_kernel(x_ref, h_ref, wx_ref, wh_ref, b_ref, o_ref, *, size, gp):
    """Fused matmul + gating for one batch tile.

    x_ref:  [TILE_B, inp_size]      fp32
    h_ref:  [TILE_B, size]          fp32
    wx_ref: [inp_size, 3*gp]        fp32 or bf16 (gate order [reset|update|cand],
    wh_ref: [size,     3*gp]        each gate padded to gp = round_up(size,128))
    b_ref:  [1, 3*gp]               fp32, update_bias already folded in
    o_ref:  [TILE_B, size]
    """
    x = x_ref[...]
    h = h_ref[...]
    wx = wx_ref[...]
    wh = wh_ref[...]

    # Two MXU pushes with a shared fp32 accumulator; LHS cast to the weight
    # dtype so bf16 weights hit the bf16-native MXU path.
    parts = (
        jnp.dot(x.astype(wx.dtype), wx, preferred_element_type=jnp.float32)
        + jnp.dot(h.astype(wh.dtype), wh, preferred_element_type=jnp.float32)
        + b_ref[...]
    )

    # Gate blocks are lane-tile aligned by construction: sigmoid over the
    # contiguous [reset | update] half, tanh over the cand block.  The [:size]
    # slices are tile-aligned prefixes (no lane rotation).
    gates = jax.nn.sigmoid(parts[:, : 2 * gp])
    reset = gates[:, :size]
    update = gates[:, gp:gp + size]
    cand = jnp.tanh(reset * parts[:, 2 * gp:2 * gp + size])

    h32 = h.astype(jnp.float32)
    # TODO(synk): at toy sizes (size=32) this store is a masked partial vst;
    # at production sizes pick size as a multiple of 128 for lane-dense stores.
    o_ref[...] = (update * cand + (1.0 - update) * h32).astype(o_ref.dtype)


def prepare_gru_params(weight, bias, inp_size, size, *, update_bias=-1.0,
                       mxu_dtype=jnp.bfloat16, lane=128):
    """One-time parameter preprocessing (hoisted out of the per-step path).

    weight: [inp_size + size, 3*size]  (transposed vs torch nn.Linear.weight),
            gate column order [reset | cand | update] (torch.split order).
    bias:   [3*size]
    mxu_dtype: matmul-operand dtype.  bf16 is recommended on v5e/v6e/v7x
               (halves weight DMA, bf16-native MXU); None keeps fp32 weights.

    Returns (wx, wh, b, gp):
      wx [inp_size, 3*gp], wh [size, 3*gp] with gate order [reset|update|cand],
      each gate zero-padded to gp = round_up(size, lane); b [1, 3*gp] fp32 with
      update_bias folded into the update-gate columns.
    """
    assert weight.shape == (inp_size + size, 3 * size)
    assert bias.shape == (3 * size,)
    gp = -(-size // lane) * lane
    pad = gp - size

    w_r = weight[:, :size]
    w_c = weight[:, size:2 * size]
    w_u = weight[:, 2 * size:]

    def pad_cols(w):
        return jnp.pad(w, ((0, 0), (0, pad))) if pad else w

    w_all = jnp.concatenate([pad_cols(w_r), pad_cols(w_u), pad_cols(w_c)],
                            axis=-1)
    if mxu_dtype is not None:
        w_all = w_all.astype(mxu_dtype)
    wx = w_all[:inp_size]
    wh = w_all[inp_size:]

    b_r = bias[:size].astype(jnp.float32)
    b_c = bias[size:2 * size].astype(jnp.float32)
    b_u = bias[2 * size:].astype(jnp.float32) + jnp.float32(update_bias)

    def pad_b(b):
        return jnp.pad(b, (0, pad)) if pad else b

    b_all = jnp.concatenate([pad_b(b_r), pad_b(b_u), pad_b(b_c)])
    return wx, wh, b_all.reshape(1, 3 * gp), gp


def _pick_tile_b(batch, bytes_per_row, act_vmem_budget=8 << 20):
    """Batch tile: largest multiple of 8 dividing B under the VMEM budget,
    with >= 2 grid steps whenever B >= 16 (so v7x's two TCs both get work)."""
    if batch < 16 or batch % 8 != 0:
        return batch
    # Budget halved for double-buffered activation tiles.
    max_rows = max(8, (act_vmem_budget // 2) // max(bytes_per_row, 1))
    max_rows = min(max_rows, batch // 2)  # keep at least 2 grid steps
    tile = 8
    t = 8
    while t <= max_rows:
        if batch % t == 0:
            tile = t
        t += 8
    return tile


def gru_cell_forward(inputs, state, wx, wh, b, gp):
    """Pallas GRUCell forward (single step).

    inputs: [B, inp_size]   state: [B, size]
    wx/wh/b/gp: output of prepare_gru_params (cached by the caller).
    Returns output [B, size]  (the torch module returns (output, [output])).
    """
    B, inp_size = inputs.shape
    _, size = state.shape
    assert wx.shape == (inp_size, 3 * gp)
    assert wh.shape == (size, 3 * gp)
    assert b.shape == (1, 3 * gp)

    bytes_per_row = (inp_size + 2 * size) * 4  # x + h + out rows, fp32
    tile_b = _pick_tile_b(B, bytes_per_row)
    assert B % tile_b == 0
    grid = (B // tile_b,)

    w_itemsize = jnp.dtype(wx.dtype).itemsize
    # VMEM estimate: double-buffered activation tiles + (double-buffered)
    # resident weights/bias; clamp the scoped limit into [16 MiB, 64 MiB].
    act_bytes = tile_b * (inp_size + 2 * size) * 4
    resid_bytes = (inp_size + size) * 3 * gp * w_itemsize + 3 * gp * 4
    vmem_limit = int(min(64 << 20, max(16 << 20, 4 * (act_bytes + resid_bytes))))

    cost = pl.CostEstimate(
        flops=int(2 * B * (inp_size + size) * 3 * gp + 8 * B * size),
        transcendentals=int(B * (2 * gp + size)),
        bytes_accessed=int(B * inp_size * 4 + B * size * 4
                           + (inp_size + size) * 3 * gp * w_itemsize
                           + 3 * gp * 4 + B * size * 4),
    )

    kernel = functools.partial(_gru_kernel, size=size, gp=gp)

    out = pl.pallas_call(
        kernel,
        out_shape=jax.ShapeDtypeStruct((B, size), inputs.dtype),
        grid=grid,
        in_specs=[
            pl.BlockSpec((tile_b, inp_size), lambda i: (i, 0)),
            pl.BlockSpec((tile_b, size), lambda i: (i, 0)),
            pl.BlockSpec((inp_size, 3 * gp), lambda i: (0, 0)),  # resident
            pl.BlockSpec((size, 3 * gp), lambda i: (0, 0)),      # resident
            pl.BlockSpec((1, 3 * gp), lambda i: (0, 0)),         # resident
        ],
        out_specs=pl.BlockSpec((tile_b, size), lambda i: (i, 0)),
        compiler_params=pltpu.CompilerParams(
            dimension_semantics=("parallel",),
            vmem_limit_bytes=vmem_limit),
        cost_estimate=cost,
    )(inputs, state, wx, wh, b)
    return out


def gru_cell_reference(inputs, state, weight, bias, *, update_bias=-1.0):
    """Pure-JAX reference matching the PyTorch forward exactly."""
    size = state.shape[-1]
    parts = jnp.concatenate([inputs, state], axis=-1) @ weight + bias
    reset, cand, update = (parts[:, :size], parts[:, size:2 * size],
                           parts[:, 2 * size:])
    reset = jax.nn.sigmoid(reset)
    cand = jnp.tanh(reset * cand)
    update = jax.nn.sigmoid(update + update_bias)
    return update * cand + (1.0 - update) * state


if __name__ == "__main__":
    INP_SIZE = 64
    SIZE = 32  # hidden / state size

    key = jax.random.PRNGKey(0)
    k_x, k_w, k_b = jax.random.split(key, 3)

    # Deterministic Linear(inp_size + size, 3*size) init, PyTorch-style
    # uniform(-1/sqrt(fan_in), 1/sqrt(fan_in)).
    fan_in = INP_SIZE + SIZE
    bound = 1.0 / (fan_in ** 0.5)
    weight = jax.random.uniform(k_w, (fan_in, 3 * SIZE), dtype=jnp.float32,
                                minval=-bound, maxval=bound)
    bias = jax.random.uniform(k_b, (3 * SIZE,), dtype=jnp.float32,
                              minval=-bound, maxval=bound)

    # One-time parameter preparation (the per-step path never touches the raw
    # torch-layout weight again).
    params_f32 = prepare_gru_params(weight, bias, INP_SIZE, SIZE,
                                    update_bias=-1.0, mxu_dtype=None)
    params_bf16 = prepare_gru_params(weight, bias, INP_SIZE, SIZE,
                                     update_bias=-1.0, mxu_dtype=jnp.bfloat16)

    # Small single-block case + a batch-tiled (grid >= 2, both v7x TCs) case.
    for B in (8, 256):
        kx, kh = jax.random.split(jax.random.fold_in(k_x, B))
        inputs = jax.random.normal(kx, (B, INP_SIZE), dtype=jnp.float32)
        state = jax.random.normal(kh, (B, SIZE), dtype=jnp.float32)

        ref = gru_cell_reference(inputs, state, weight, bias, update_bias=-1.0)

        # fp32 MXU path: tight tolerance vs the fp32 reference.
        out = jax.block_until_ready(gru_cell_forward(inputs, state, *params_f32))
        assert out.shape == (B, SIZE)
        assert jnp.allclose(out, ref, atol=1e-5, rtol=1e-5), "fp32 mismatch"

        # bf16-MXU weights (recommended on v5e/v6e/v7x): looser tolerance.
        out_bf16 = jax.block_until_ready(
            gru_cell_forward(inputs, state, *params_bf16))
        assert out_bf16.shape == (B, SIZE)
        assert jnp.allclose(out_bf16, ref, atol=2e-2, rtol=2e-2), "bf16 mismatch"

    print("KERNEL_OK")
</pallas_src>

<mosaic_0001>
module attributes {stable_mosaic.version = 11 : i64} {
  func.func @_gru_kernel(%arg0: i32, %arg1: memref<8x64xf32, #tpu.memory_space<vmem>>, %arg2: memref<8x32xf32, #tpu.memory_space<vmem>>, %arg3: memref<64x384xf32, #tpu.memory_space<vmem>>, %arg4: memref<32x384xf32, #tpu.memory_space<vmem>>, %arg5: memref<1x384xf32, #tpu.memory_space<vmem>>, %arg6: memref<8x32xf32, #tpu.memory_space<vmem>>) attributes {dimension_semantics = [#tpu.dimension_semantics<parallel>], iteration_bounds = array<i64: 1>, scalar_prefetch = 0 : i64, scratch_operands = 0 : i64, tpu.core_type = #tpu.core_type<tc>, window_params = [{transform_indices = @transform_0, window_bounds = array<i64: 8, 64>}, {transform_indices = @transform_1, window_bounds = array<i64: 8, 32>}, {pipeline_mode = #tpu.pipeline_mode<synchronous>, transform_indices = @transform_2, window_bounds = array<i64: 64, 384>}, {pipeline_mode = #tpu.pipeline_mode<synchronous>, transform_indices = @transform_3, window_bounds = array<i64: 32, 384>}, {pipeline_mode = #tpu.pipeline_mode<synchronous>, transform_indices = @transform_4, window_bounds = array<i64: 1, 384>}, {transform_indices = @transform_5, window_bounds = array<i64: 8, 32>}]} {
    %c0 = arith.constant 0 : index
    %c0_0 = arith.constant 0 : index
    %0 = vector.load %arg1[%c0, %c0_0] : memref<8x64xf32, #tpu.memory_space<vmem>>, vector<8x64xf32>
    %c0_1 = arith.constant 0 : index
    %c0_2 = arith.constant 0 : index
    %1 = vector.load %arg2[%c0_1, %c0_2] : memref<8x32xf32, #tpu.memory_space<vmem>>, vector<8x32xf32>
    %c0_3 = arith.constant 0 : index
    %c0_4 = arith.constant 0 : index
    %2 = vector.load %arg3[%c0_3, %c0_4] : memref<64x384xf32, #tpu.memory_space<vmem>>, vector<64x384xf32>
    %c0_5 = arith.constant 0 : index
    %c0_6 = arith.constant 0 : index
    %3 = vector.load %arg4[%c0_5, %c0_6] : memref<32x384xf32, #tpu.memory_space<vmem>>, vector<32x384xf32>
    %cst = arith.constant dense<0.000000e+00> : vector<8x384xf32>
    %4 = tpu.matmul %0, %2, %cst {dimension_numbers = #tpu.dot_dimension_numbers<[1], [0], [0], [1], [0, 0, 1, 1], [], []>} : vector<8x64xf32>, vector<64x384xf32>, vector<8x384xf32> -> vector<8x384xf32>
    %cst_7 = arith.constant dense<0.000000e+00> : vector<8x384xf32>
    %5 = tpu.matmul %1, %3, %cst_7 {dimension_numbers = #tpu.dot_dimension_numbers<[1], [0], [0], [1], [0, 0, 1, 1], [], []>} : vector<8x32xf32>, vector<32x384xf32>, vector<8x384xf32> -> vector<8x384xf32>
    %6 = arith.addf %4, %5 : vector<8x384xf32>
    %c0_8 = arith.constant 0 : index
    %c0_9 = arith.constant 0 : index
    %7 = vector.load %arg5[%c0_8, %c0_9] : memref<1x384xf32, #tpu.memory_space<vmem>>, vector<1x384xf32>
    %8 = vector.broadcast %7 : vector<1x384xf32> to vector<8x384xf32>
    %9 = arith.addf %6, %8 : vector<8x384xf32>
    %10 = vector.extract_strided_slice %9 {offsets = [0, 0], sizes = [8, 256], strides = [1, 1]} : vector<8x384xf32> to vector<8x256xf32>
    %11 = arith.negf %10 : vector<8x256xf32>
    %12 = math.exp %11 : vector<8x256xf32>
    %cst_10 = arith.constant 1.000000e+00 : f32
    %13 = vector.broadcast %cst_10 : f32 to vector<8x256xf32>
    %14 = arith.addf %13, %12 : vector<8x256xf32>
    %15 = arith.divf %13, %14 : vector<8x256xf32>
    %16 = vector.extract_strided_slice %15 {offsets = [0, 0], sizes = [8, 32], strides = [1, 1]} : vector<8x256xf32> to vector<8x32xf32>
    %17 = vector.extract_strided_slice %15 {offsets = [0, 128], sizes = [8, 32], strides = [1, 1]} : vector<8x256xf32> to vector<8x32xf32>
    %18 = vector.extract_strided_slice %9 {offsets = [0, 256], sizes = [8, 32], strides = [1, 1]} : vector<8x384xf32> to vector<8x32xf32>
    %19 = arith.mulf %16, %18 : vector<8x32xf32>
    %20 = math.tanh %19 : vector<8x32xf32>
    %21 = arith.mulf %17, %20 : vector<8x32xf32>
    %cst_11 = arith.constant 1.000000e+00 : f32
    %22 = vector.broadcast %cst_11 : f32 to vector<8x32xf32>
    %23 = arith.subf %22, %17 : vector<8x32xf32>
    %24 = arith.mulf %23, %1 : vector<8x32xf32>
    %25 = arith.addf %21, %24 : vector<8x32xf32>
    %c0_12 = arith.constant 0 : index
    %c0_13 = arith.constant 0 : index
    %26 = vector.load %arg6[%c0_12, %c0_13] : memref<8x32xf32, #tpu.memory_space<vmem>>, vector<8x32xf32>
    tpu.vector_store %arg6[%c0_12, %c0_13], %25 {strides = array<i32>} : memref<8x32xf32, #tpu.memory_space<vmem>>, vector<8x32xf32>,
    return
  }
  func.func @transform_0(%arg0: i32) -> (i32, i32) {
    %c0_i32 = arith.constant 0 : i32
    %c0_i32_0 = arith.constant 0 : i32
    return %arg0, %c0_i32 : i32, i32
  }
  func.func @transform_1(%arg0: i32) -> (i32, i32) {
    %c0_i32 = arith.constant 0 : i32
    %c0_i32_0 = arith.constant 0 : i32
    return %arg0, %c0_i32 : i32, i32
  }
  func.func @transform_2(%arg0: i32) -> (i32, i32) {
    %c0_i32 = arith.constant 0 : i32
    %c0_i32_0 = arith.constant 0 : i32
    %c0_i32_1 = arith.constant 0 : i32
    return %c0_i32, %c0_i32_0 : i32, i32
  }
  func.func @transform_3(%arg0: i32) -> (i32, i32) {
    %c0_i32 = arith.constant 0 : i32
    %c0_i32_0 = arith.constant 0 : i32
    %c0_i32_1 = arith.constant 0 : i32
    return %c0_i32, %c0_i32_0 : i32, i32
  }
  func.func @transform_4(%arg0: i32) -> (i32, i32) {
    %c0_i32 = arith.constant 0 : i32
    %c0_i32_0 = arith.constant 0 : i32
    %c0_i32_1 = arith.constant 0 : i32
    return %c0_i32, %c0_i32_0 : i32, i32
  }
  func.func @transform_5(%arg0: i32) -> (i32, i32) {
    %c0_i32 = arith.constant 0 : i32
    %c0_i32_0 = arith.constant 0 : i32
    return %arg0, %c0_i32 : i32, i32
  }
}

</mosaic_0001>

<llo_original>
// kernel: tpu_custom_call.1
$region0: #{tpu_custom_call.1}
  #allocation0 [shape = 'u32[]', space=smem, size = 0x4, offset = 0x4, fixed_abs, tag = 'smem constant byte address 0x4 - core index']
  #allocation1 [shape = 'u32[144,128]{1,0:T(1,128)}', space=vmem, size = 0x12000, scoped, tag = 'internal scratch']
  %s0 = inlined_call_operand.hbm [shape: f32[8,64], index: 0, kind: input, shape index: {}]
  %s1 = inlined_call_operand.hbm [shape: f32[8,32], index: 1, kind: input, shape index: {}]
  %s2 = inlined_call_operand.hbm [shape: f32[64,384], index: 2, kind: input, shape index: {}]
  %s3 = inlined_call_operand.hbm [shape: f32[32,384], index: 3, kind: input, shape index: {}]
  %s4 = inlined_call_operand.vmem [shape: f32[1,384], index: 4, kind: input, shape index: {}]
  %s5 = inlined_call_operand.hbm [shape: f32[8,32], index: 5, kind: output, shape index: {}]
  %s6 = sld [smem:[#allocation0]]
  $region46: #{tpu_custom_call.1} parent=0
    _
  %s8 = ssub.s32 1, %s6
  %s9 = scalar_select 0, %s8, %s6
  $region1: #{tpu_custom_call.1} parent=0
    #allocation2 [shape = 'u8[4096]{0}', space=vmem, size = 0x1000, scoped, tag = 'input window, operand 0, single buffered']
    #allocation3 [shape = 's32[1]{0}', space=sflag, size = 0x4, scoped, tag = 'scoped memory for tpu_custom_call.1']
    #allocation4 [shape = 's32[1]{0}', space=sflag, size = 0x4, scoped, tag = 'scoped memory for tpu_custom_call.1']
    #allocation5 [shape = 'u8[4096]{0}', space=vmem, size = 0x1000, scoped, tag = 'input window, operand 1, single buffered']
    #allocation6 [shape = 's32[1]{0}', space=sflag, size = 0x4, scoped, tag = 'scoped memory for tpu_custom_call.1']
    #allocation7 [shape = 'u8[98304]{0}', space=vmem, size = 0x18000, scoped, tag = 'input window, operand 2, single buffered']
    #allocation8 [shape = 'u8[49152]{0}', space=vmem, size = 0xc000, scoped, tag = 'input window, operand 3, single buffered']
    #allocation9 [shape = 's32[1]{0}', space=sflag, size = 0x4, scoped, tag = 'scoped memory for tpu_custom_call.1']
    #allocation10 [shape = 'u8[4096]{0}', space=vmem, size = 0x1000, scoped, tag = 'output window, operand 0, single buffered']
    %10 = vsyncpa [#allocation3], 0
    %11 = vsyncpa [#allocation6], 0
    %12 = vsyncpa [#allocation9], 0
    %13 = vsyncpa [#allocation4], 0
    // Predicated region
    $region2: #{tpu_custom_call.1} parent=1 // pred_check
      _
    $region3: #{tpu_custom_call.1} parent=1 // pred_check_branch
      %15 = sbr.rel (0) target = $region5
    $region4: #{tpu_custom_call.1} parent=1 // pred_region
      %s17 = ssub.s32 128, 128
      %18 = vsyncadd [#allocation3], %s17
      %s20 = sshll.u32 [#allocation2], 4
      %s21 = int_to_ptr.vmem [resolvable:$true] %s20
      %23 = dma.hbm_to_vmem [thread:$0]  %s0, 128, %s21, [#allocation3]
    $region5: #{tpu_custom_call.1} parent=1 // pred_fallthru
      _
    // Predicated region
    $region6: #{tpu_custom_call.1} parent=1 // pred_check
      _
    $region7: #{tpu_custom_call.1} parent=1 // pred_check_branch
      %25 = sbr.rel (0) target = $region9
    $region8: #{tpu_custom_call.1} parent=1 // pred_region
      %s27 = ssub.s32 128, 128
      %28 = vsyncadd [#allocation6], %s27
      %s30 = sshll.u32 [#allocation5], 4
      %s31 = int_to_ptr.vmem [resolvable:$true] %s30
      %33 = dma.hbm_to_vmem [thread:$0]  %s1, 128, %s31, [#allocation6]
    $region9: #{tpu_custom_call.1} parent=1 // pred_fallthru
      _
    // Predicated region
    $region10: #{tpu_custom_call.1} parent=1 // pred_check
      _
    $region11: #{tpu_custom_call.1} parent=1 // pred_check_branch
      %35 = sbr.rel (0) target = $region13
    $region12: #{tpu_custom_call.1} parent=1 // pred_region
      %s37 = ssub.s32 3072, 3072
      %38 = vsyncadd [#allocation6], %s37
      %s39 = sshll.u32 [#allocation7], 4
      %s40 = int_to_ptr.vmem [resolvable:$true] %s39
      %45 = dma.hbm_to_vmem [thread:$0]  %s2, 3072, %s40, [#allocation6], 384, 384, 24
    $region13: #{tpu_custom_call.1} parent=1 // pred_fallthru
      _
    // Predicated region
    $region14: #{tpu_custom_call.1} parent=1 // pred_check
      _
    $region15: #{tpu_custom_call.1} parent=1 // pred_check_branch
      %47 = sbr.rel (0) target = $region17
    $region16: #{tpu_custom_call.1} parent=1 // pred_region
      %s49 = ssub.s32 1536, 1536
      %50 = vsyncadd [#allocation9], %s49
      %s51 = sshll.u32 [#allocation8], 4
      %s52 = int_to_ptr.vmem [resolvable:$true] %s51
      %57 = dma.hbm_to_vmem [thread:$0]  %s3, 1536, %s52, [#allocation9], 384, 384, 24
    $region17: #{tpu_custom_call.1} parent=1 // pred_fallthru
      _
    // Predicated region
    $region18: #{tpu_custom_call.1} parent=1 // pred_check
      _
    $region19: #{tpu_custom_call.1} parent=1 // pred_check_branch
      %59 = sbr.rel (0) target = $region21
    $region20: #{tpu_custom_call.1} parent=1 // pred_region
      _
    $region21: #{tpu_custom_call.1} parent=1 // pred_fallthru
      _
    // Predicated region
    $region22: #{tpu_custom_call.1} parent=1 // pred_check
      _
    $region23: #{tpu_custom_call.1} parent=1 // pred_check_branch
      %61 = sbr.rel (0) target = $region25
    $region24: #{tpu_custom_call.1} parent=1 // pred_region
      %62 = dma.done [#allocation3], 128
    $region25: #{tpu_custom_call.1} parent=1 // pred_fallthru
      _
    // Predicated region
    $region26: #{tpu_custom_call.1} parent=1 // pred_check
      _
    $region27: #{tpu_custom_call.1} parent=1 // pred_check_branch
      %64 = sbr.rel (0) target = $region29
    $region28: #{tpu_custom_call.1} parent=1 // pred_region
      %65 = dma.done [#allocation6], 128
    $region29: #{tpu_custom_call.1} parent=1 // pred_fallthru
      _
    // Predicated region
    $region30: #{tpu_custom_call.1} parent=1 // pred_check
      _
    $region31: #{tpu_custom_call.1} parent=1 // pred_check_branch
      %67 = sbr.rel (0) target = $region33
    $region32: #{tpu_custom_call.1} parent=1 // pred_region
      %68 = dma.done [#allocation6], 3072
    $region33: #{tpu_custom_call.1} parent=1 // pred_fallthru
      _
    // Predicated region
    $region34: #{tpu_custom_call.1} parent=1 // pred_check
      _
    $region35: #{tpu_custom_call.1} parent=1 // pred_check_branch
      %70 = sbr.rel (0) target = $region37
    $region36: #{tpu_custom_call.1} parent=1 // pred_region
      %71 = dma.done [#allocation9], 1536
    $region37: #{tpu_custom_call.1} parent=1 // pred_fallthru
      _
    %v72 = vld [vmem:[#allocation2] sm:$0xff]
    %v73 = vld [vmem:[#allocation5] sm:$0xff]
    %v74 = vld [vmem:[#allocation7] sm:$0xff]
    %v75 = vld [vmem:[#allocation7 + $0x8] sm:$0xff]
    %v76 = vld [vmem:[#allocation7 + $0x10] sm:$0xff]
    %v77 = vld [vmem:[#allocation7 + $0x18] sm:$0xff]
    %v78 = vld [vmem:[#allocation7 + $0x20] sm:$0xff]
    %v79 = vld [vmem:[#allocation7 + $0x28] sm:$0xff]
    %v80 = vld [vmem:[#allocation7 + $0x30] sm:$0xff]
    %v81 = vld [vmem:[#allocation7 + $0x38] sm:$0xff]
    %v82 = vld [vmem:[#allocation7 + $0x40] sm:$0xff]
    %v83 = vld [vmem:[#allocation7 + $0x48] sm:$0xff]
    %v84 = vld [vmem:[#allocation7 + $0x50] sm:$0xff]
    %v85 = vld [vmem:[#allocation7 + $0x58] sm:$0xff]
    %v86 = vld [vmem:[#allocation7 + $0x60] sm:$0xff]
    %v87 = vld [vmem:[#allocation7 + $0x68] sm:$0xff]
    %v88 = vld [vmem:[#allocation7 + $0x70] sm:$0xff]
    %v89 = vld [vmem:[#allocation7 + $0x78] sm:$0xff]
    %v90 = vld [vmem:[#allocation7 + $0x80] sm:$0xff]
    %v91 = vld [vmem:[#allocation7 + $0x88] sm:$0xff]
    %v92 = vld [vmem:[#allocation7 + $0x90] sm:$0xff]
    %v93 = vld [vmem:[#allocation7 + $0x98] sm:$0xff]
    %v94 = vld [vmem:[#allocation7 + $0xa0] sm:$0xff]
    %v95 = vld [vmem:[#allocation7 + $0xa8] sm:$0xff]
    %v96 = vld [vmem:[#allocation7 + $0xb0] sm:$0xff]
    %v97 = vld [vmem:[#allocation7 + $0xb8] sm:$0xff]
    %v98 = vld [vmem:[#allocation8] sm:$0xff]
    %v99 = vld [vmem:[#allocation8 + $0x8] sm:$0xff]
    %v100 = vld [vmem:[#allocation8 + $0x10] sm:$0xff]
    %v101 = vld [vmem:[#allocation8 + $0x18] sm:$0xff]
    %v102 = vld [vmem:[#allocation8 + $0x20] sm:$0xff]
    %v103 = vld [vmem:[#allocation8 + $0x28] sm:$0xff]
    %v104 = vld [vmem:[#allocation8 + $0x30] sm:$0xff]
    %v105 = vld [vmem:[#allocation8 + $0x38] sm:$0xff]
    %v106 = vld [vmem:[#allocation8 + $0x40] sm:$0xff]
    %v107 = vld [vmem:[#allocation8 + $0x48] sm:$0xff]
    %v108 = vld [vmem:[#allocation8 + $0x50] sm:$0xff]
    %v109 = vld [vmem:[#allocation8 + $0x58] sm:$0xff]
    %vm110 = vcmask 261120
    %v112 = vsel %vm110, %v73, 0
    %114 = vmatprep.subr.mxu0 0.0
    %115 = vmatpush1.msra.mxu0 0.0
    %116 = vmatprep.subr.mxu0 0.0
    %117 = vmatpush1.msra.mxu0 0.0
    %118 = vmatprep.subr.mxu0 0.0
    %119 = vmatpush1.msra.mxu0 0.0
    %120 = vmatprep.subr.mxu0 0.0
    %121 = vmatpush1.msra.mxu0 0.0
    %122 = vmatprep.subr.mxu0 0.0
    %123 = vmatpush1.msra.mxu0 0.0
    %124 = vmatprep.subr.mxu0 0.0
    %125 = vmatpush1.msra.mxu0 0.0
    %126 = vmatprep.subr.mxu0 0.0
    %127 = vmatpush1.msra.mxu0 0.0
    %128 = vmatprep.subr.mxu0 0.0
    %129 = vmatpush1.msra.mxu0 0.0
    %130 = vmatprep.subr.mxu0 0.0
    %131 = vmatpush1.msra.mxu0 0.0
    %132 = vmatprep.subr.mxu0 0.0
    %133 = vmatpush1.msra.mxu0 0.0
    %134 = vmatprep.subr.mxu0 0.0
    %135 = vmatpush1.msra.mxu0 0.0
    %136 = vmatprep.subr.mxu0 0.0
    %137 = vmatpush1.msra.mxu0 0.0
    %138 = vmatprep.subr.mxu0 %v108
    %139 = vmatpush1.msra.mxu0 %v107
    %140 = vmatprep.subr.mxu0 %v105
    %141 = vmatpush1.msra.mxu0 %v104
    %142 = vmatprep.subr.mxu0 %v102
    %143 = vmatpush1.msra.mxu0 %v101
    %144 = vmatprep.subr.mxu0 %v99
    %145 = vmatpush1.msra.mxu0 %v98
    %146 = vmatprep.subr.mxu0 0.0
    %147 = vmatpush2.msra.mxu0 0.0
    %148 = vmatprep.subr.mxu0 0.0
    %149 = vmatpush2.msra.mxu0 0.0
    %150 = vmatprep.subr.mxu0 0.0
    %151 = vmatpush2.msra.mxu0 0.0
    %152 = vmatprep.subr.mxu0 0.0
    %153 = vmatpush2.msra.mxu0 0.0
    %154 = vmatprep.subr.mxu0 0.0
    %155 = vmatpush2.msra.mxu0 0.0
    %156 = vmatprep.subr.mxu0 0.0
    %157 = vmatpush2.msra.mxu0 0.0
    %158 = vmatprep.subr.mxu0 0.0
    %159 = vmatpush2.msra.mxu0 0.0
    %160 = vmatprep.subr.mxu0 0.0
    %161 = vmatpush2.msra.mxu0 0.0
    %162 = vmatprep.subr.mxu0 0.0
    %163 = vmatpush2.msra.mxu0 0.0
    %164 = vmatprep.subr.mxu0 0.0
    %165 = vmatpush2.msra.mxu0 0.0
    %166 = vmatprep.subr.mxu0 0.0
    %167 = vmatpush2.msra.mxu0 0.0
    %168 = vmatprep.subr.mxu0 0.0
    %169 = vmatpush2.msra.mxu0 0.0
    %170 = vmatprep.subr.mxu0 0.0
    %171 = vmatpush2.msra.mxu0 0.0
    %172 = vmatprep.subr.mxu0 0.0
    %173 = vmatpush2.msra.mxu0 0.0
    %174 = vmatprep.subr.mxu0 0.0
    %175 = vmatpush2.msra.mxu0 0.0
    %176 = vmatprep.subr.mxu0 0.0
    %177 = vmatpush2.msra.mxu0 0.0
    %178 = vmatprep.mubr.f32.mxu0 0.0
    %179 = vmatmul.mubr.f32.gmra.mxu0 %v112
    %v180 = vpop.f32.mrf.mxu0
    %v181 = vadd.f32 0.0, %v180
    %v182 = vpop.f32.mrf.mxu0
    %v183 = vadd.f32 0.0, %v182
    %184 = vdwg.mxu0
    %185 = vmatprep.subr.mxu0 0.0
    %186 = vmatpush1.msra.mxu0 0.0
    %187 = vmatprep.subr.mxu0 0.0
    %188 = vmatpush1.msra.mxu0 0.0
    %189 = vmatprep.subr.mxu0 0.0
    %190 = vmatpush1.msra.mxu0 0.0
    %191 = vmatprep.subr.mxu0 0.0
    %192 = vmatpush1.msra.mxu0 0.0
    %193 = vmatprep.subr.mxu0 0.0
    %194 = vmatpush1.msra.mxu0 0.0
    %195 = vmatprep.subr.mxu0 0.0
    %196 = vmatpush1.msra.mxu0 0.0
    %197 = vmatprep.subr.mxu0 0.0
    %198 = vmatpush1.msra.mxu0 0.0
    %199 = vmatprep.subr.mxu0 0.0
    %200 = vmatpush1.msra.mxu0 0.0
    %201 = vmatprep.subr.mxu0 0.0
    %202 = vmatpush1.msra.mxu0 0.0
    %203 = vmatprep.subr.mxu0 0.0
    %204 = vmatpush1.msra.mxu0 0.0
    %205 = vmatprep.subr.mxu0 0.0
    %206 = vmatpush1.msra.mxu0 0.0
    %207 = vmatprep.subr.mxu0 0.0
    %208 = vmatpush1.msra.mxu0 0.0
    %209 = vmatprep.subr.mxu0 0.0
    %210 = vmatpush1.msra.mxu0 %v109
    %211 = vmatprep.subr.mxu0 0.0
    %212 = vmatpush1.msra.mxu0 %v106
    %213 = vmatprep.subr.mxu0 0.0
    %214 = vmatpush1.msra.mxu0 %v103
    %215 = vmatprep.subr.mxu0 0.0
    %216 = vmatpush1.msra.mxu0 %v100
    %217 = vmatprep.subr.mxu0 0.0
    %218 = vmatpush2.msra.mxu0 0.0
    %219 = vmatprep.subr.mxu0 0.0
    %220 = vmatpush2.msra.mxu0 0.0
    %221 = vmatprep.subr.mxu0 0.0
    %222 = vmatpush2.msra.mxu0 0.0
    %223 = vmatprep.subr.mxu0 0.0
    %224 = vmatpush2.msra.mxu0 0.0
    %225 = vmatprep.subr.mxu0 0.0
    %226 = vmatpush2.msra.mxu0 0.0
    %227 = vmatprep.subr.mxu0 0.0
    %228 = vmatpush2.msra.mxu0 0.0
    %229 = vmatprep.subr.mxu0 0.0
    %230 = vmatpush2.msra.mxu0 0.0
    %231 = vmatprep.subr.mxu0 0.0
    %232 = vmatpush2.msra.mxu0 0.0
    %233 = vmatprep.subr.mxu0 0.0
    %234 = vmatpush2.msra.mxu0 0.0
    %235 = vmatprep.subr.mxu0 0.0
    %236 = vmatpush2.msra.mxu0 0.0
    %237 = vmatprep.subr.mxu0 0.0
    %238 = vmatpush2.msra.mxu0 0.0
    %239 = vmatprep.subr.mxu0 0.0
    %240 = vmatpush2.msra.mxu0 0.0
    %241 = vmatprep.subr.mxu0 0.0
    %242 = vmatpush2.msra.mxu0 0.0
    %243 = vmatprep.subr.mxu0 0.0
    %244 = vmatpush2.msra.mxu0 0.0
    %245 = vmatprep.subr.mxu0 0.0
    %246 = vmatpush2.msra.mxu0 0.0
    %247 = vmatprep.subr.mxu0 0.0
    %248 = vmatpush2.msra.mxu0 0.0
    %249 = vmatprep.mubr.f32.mxu0 0.0
    %250 = vmatmul.mubr.f32.gmra.mxu0 %v112
    %v251 = vpop.f32.mrf.mxu0
    %v252 = vadd.f32 0.0, %v251
    %v253 = vpop.f32.mrf.mxu0
    %254 = vdwg.mxu0
    %vm255 = vcmask 523264
    %v257 = vsel %vm255, %v72, 0
    %259 = vmatprep.subr.mxu0 0.0
    %260 = vmatpush1.msra.mxu0 0.0
    %261 = vmatprep.subr.mxu0 0.0
    %262 = vmatpush1.msra.mxu0 0.0
    %263 = vmatprep.subr.mxu0 0.0
    %264 = vmatpush1.msra.mxu0 0.0
    %265 = vmatprep.subr.mxu0 0.0
    %266 = vmatpush1.msra.mxu0 0.0
    %267 = vmatprep.subr.mxu0 0.0
    %268 = vmatpush1.msra.mxu0 0.0
    %269 = vmatprep.subr.mxu0 0.0
    %270 = vmatpush1.msra.mxu0 0.0
    %271 = vmatprep.subr.mxu0 0.0
    %272 = vmatpush1.msra.mxu0 0.0
    %273 = vmatprep.subr.mxu0 0.0
    %274 = vmatpush1.msra.mxu0 0.0
    %275 = vmatprep.subr.mxu0 %v96
    %276 = vmatpush1.msra.mxu0 %v95
    %277 = vmatprep.subr.mxu0 %v93
    %278 = vmatpush1.msra.mxu0 %v92
    %279 = vmatprep.subr.mxu0 %v90
    %280 = vmatpush1.msra.mxu0 %v89
    %281 = vmatprep.subr.mxu0 %v87
    %282 = vmatpush1.msra.mxu0 %v86
    %283 = vmatprep.subr.mxu0 %v84
    %284 = vmatpush1.msra.mxu0 %v83
    %285 = vmatprep.subr.mxu0 %v81
    %286 = vmatpush1.msra.mxu0 %v80
    %287 = vmatprep.subr.mxu0 %v78
    %288 = vmatpush1.msra.mxu0 %v77
    %289 = vmatprep.subr.mxu0 %v75
    %290 = vmatpush1.msra.mxu0 %v74
    %291 = vmatprep.subr.mxu0 0.0
    %292 = vmatpush2.msra.mxu0 0.0
    %293 = vmatprep.subr.mxu0 0.0
    %294 = vmatpush2.msra.mxu0 0.0
    %295 = vmatprep.subr.mxu0 0.0
    %296 = vmatpush2.msra.mxu0 0.0
    %297 = vmatprep.subr.mxu0 0.0
    %298 = vmatpush2.msra.mxu0 0.0
    %299 = vmatprep.subr.mxu0 0.0
    %300 = vmatpush2.msra.mxu0 0.0
    %301 = vmatprep.subr.mxu0 0.0
    %302 = vmatpush2.msra.mxu0 0.0
    %303 = vmatprep.subr.mxu0 0.0
    %304 = vmatpush2.msra.mxu0 0.0
    %305 = vmatprep.subr.mxu0 0.0
    %306 = vmatpush2.msra.mxu0 0.0
    %307 = vmatprep.subr.mxu0 0.0
    %308 = vmatpush2.msra.mxu0 0.0
    %309 = vmatprep.subr.mxu0 0.0
    %310 = vmatpush2.msra.mxu0 0.0
    %311 = vmatprep.subr.mxu0 0.0
    %312 = vmatpush2.msra.mxu0 0.0
    %313 = vmatprep.subr.mxu0 0.0
    %314 = vmatpush2.msra.mxu0 0.0
    %315 = vmatprep.subr.mxu0 0.0
    %316 = vmatpush2.msra.mxu0 0.0
    %317 = vmatprep.subr.mxu0 0.0
    %318 = vmatpush2.msra.mxu0 0.0
    %319 = vmatprep.subr.mxu0 0.0
    %320 = vmatpush2.msra.mxu0 0.0
    %321 = vmatprep.subr.mxu0 0.0
    %322 = vmatpush2.msra.mxu0 0.0
    %323 = vmatprep.mubr.f32.mxu0 0.0
    %324 = vmatmul.mubr.f32.gmra.mxu0 %v257
    %v325 = vpop.f32.mrf.mxu0
    %v326 = vadd.f32 %v181, %v325
    %v327 = vpop.f32.mrf.mxu0
    %v328 = vadd.f32 %v183, %v327
    %329 = vdwg.mxu0
    %330 = vmatprep.subr.mxu0 0.0
    %331 = vmatpush1.msra.mxu0 0.0
    %332 = vmatprep.subr.mxu0 0.0
    %333 = vmatpush1.msra.mxu0 0.0
    %334 = vmatprep.subr.mxu0 0.0
    %335 = vmatpush1.msra.mxu0 0.0
    %336 = vmatprep.subr.mxu0 0.0
    %337 = vmatpush1.msra.mxu0 0.0
    %338 = vmatprep.subr.mxu0 0.0
    %339 = vmatpush1.msra.mxu0 0.0
    %340 = vmatprep.subr.mxu0 0.0
    %341 = vmatpush1.msra.mxu0 0.0
    %342 = vmatprep.subr.mxu0 0.0
    %343 = vmatpush1.msra.mxu0 0.0
    %344 = vmatprep.subr.mxu0 0.0
    %345 = vmatpush1.msra.mxu0 0.0
    %346 = vmatprep.subr.mxu0 0.0
    %347 = vmatpush1.msra.mxu0 %v97
    %348 = vmatprep.subr.mxu0 0.0
    %349 = vmatpush1.msra.mxu0 %v94
    %350 = vmatprep.subr.mxu0 0.0
    %351 = vmatpush1.msra.mxu0 %v91
    %352 = vmatprep.subr.mxu0 0.0
    %353 = vmatpush1.msra.mxu0 %v88
    %354 = vmatprep.subr.mxu0 0.0
    %355 = vmatpush1.msra.mxu0 %v85
    %356 = vmatprep.subr.mxu0 0.0
    %357 = vmatpush1.msra.mxu0 %v82
    %358 = vmatprep.subr.mxu0 0.0
    %359 = vmatpush1.msra.mxu0 %v79
    %360 = vmatprep.subr.mxu0 0.0
    %361 = vmatpush1.msra.mxu0 %v76
    %362 = vmatprep.subr.mxu0 0.0
    %363 = vmatpush2.msra.mxu0 0.0
    %364 = vmatprep.subr.mxu0 0.0
    %365 = vmatpush2.msra.mxu0 0.0
    %366 = vmatprep.subr.mxu0 0.0
    %367 = vmatpush2.msra.mxu0 0.0
    %368 = vmatprep.subr.mxu0 0.0
    %369 = vmatpush2.msra.mxu0 0.0
    %370 = vmatprep.subr.mxu0 0.0
    %371 = vmatpush2.msra.mxu0 0.0
    %372 = vmatprep.subr.mxu0 0.0
    %373 = vmatpush2.msra.mxu0 0.0
    %374 = vmatprep.subr.mxu0 0.0
    %375 = vmatpush2.msra.mxu0 0.0
    %376 = vmatprep.subr.mxu0 0.0
    %377 = vmatpush2.msra.mxu0 0.0
    %378 = vmatprep.subr.mxu0 0.0
    %379 = vmatpush2.msra.mxu0 0.0
    %380 = vmatprep.subr.mxu0 0.0
    %381 = vmatpush2.msra.mxu0 0.0
    %382 = vmatprep.subr.mxu0 0.0
    %383 = vmatpush2.msra.mxu0 0.0
    %384 = vmatprep.subr.mxu0 0.0
    %385 = vmatpush2.msra.mxu0 0.0
    %386 = vmatprep.subr.mxu0 0.0
    %387 = vmatpush2.msra.mxu0 0.0
    %388 = vmatprep.subr.mxu0 0.0
    %389 = vmatpush2.msra.mxu0 0.0
    %390 = vmatprep.subr.mxu0 0.0
    %391 = vmatpush2.msra.mxu0 0.0
    %392 = vmatprep.subr.mxu0 0.0
    %393 = vmatpush2.msra.mxu0 0.0
    %394 = vmatprep.mubr.f32.mxu0 0.0
    %395 = vmatmul.mubr.f32.gmra.mxu0 %v257
    %v396 = vpop.f32.mrf.mxu0
    %v397 = vadd.f32 %v252, %v396
    %v398 = vpop.f32.mrf.mxu0
    %399 = vdwg.mxu0
    %v400 = vld [vmem:[%s4] sm:$0x7]
    %v402 = vlaneseq
    %v403 = vshrl.u32 %v402, 7
    %v404 = vsub.s32 0, %v403
    %v405 = vrot.slane %v400, %v404
    %v406 = vlaneseq
    %v407 = vshrl.u32 %v406, 7
    %v408 = vsub.s32 1, %v407
    %v409 = vrot.slane %v400, %v408
    %v410 = vlaneseq
    %v411 = vshrl.u32 %v410, 7
    %v412 = vsub.s32 2, %v411
    %v413 = vrot.slane %v400, %v412
    %v417 = vadd.f32 %v326, %v405
    %v418 = vadd.f32 %v328, %v409
    %v419 = vadd.f32 %v397, %v413
    %v420 = vxor.u32 %v417, 2147483648
    %v421 = vxor.u32 %v418, 2147483648
    %v422 = vmul.f32 %v420, 1.442695
    %v423 = vpow.pop %v422
    %v424 = vmul.f32 %v421, 1.442695
    %v425 = vpow.pop %v424
    %v426 = vadd.f32 %v423, 1.0
    %v427 = vadd.f32 %v425, 1.0
    %v428 = vrcp.pop %v426
    %v429 = vmul.f32 1.0, %v428
    %v430 = vrcp.pop %v427
    %v431 = vmul.f32 1.0, %v430
    %v432 = vmul.f32 %v429, %v419
    %v433 = vtanh.pop %v432
    %v434 = vmul.f32 %v431, %v433
    %v435 = vsub.f32 1.0, %v431
    %v436 = vmul.f32 %v435, %v73
    %v437 = vadd.f32 %v434, %v436
    %438 = vst.msk [vmem:[#allocation10] sm:$0xff] %vm110, %v437
    // Predicated region
    $region38: #{tpu_custom_call.1} parent=1 // pred_check
      _
    $region39: #{tpu_custom_call.1} parent=1 // pred_check_branch
      %440 = sbr.rel (0) target = $region41
    $region40: #{tpu_custom_call.1} parent=1 // pred_region
      %s442 = ssub.s32 128, 128
      %443 = vsyncadd [#allocation4], %s442
      %s445 = sshll.u32 [#allocation10], 4
      %s446 = int_to_ptr.vmem [resolvable:$true] %s445
      %448 = dma.vmem_to_hbm [thread:$0]  %s446, 128, %s5, [#allocation4]
    $region41: #{tpu_custom_call.1} parent=1 // pred_fallthru
      _
    // Predicated region
    $region42: #{tpu_custom_call.1} parent=1 // pred_check
      _
    $region43: #{tpu_custom_call.1} parent=1 // pred_check_branch
      %450 = sbr.rel (0) target = $region45
    $region44: #{tpu_custom_call.1} parent=1 // pred_region
      %451 = dma.done [#allocation4], 128
    $region45: #{tpu_custom_call.1} parent=1 // pred_fallthru
      _
    %452 = vsyncpa [#allocation3], 1
    %453 = vsyncpa [#allocation6], 1
    %454 = vsyncpa [#allocation9], 1
    %455 = vsyncpa [#allocation4], 1

</llo_original>
